<compile_context>
chip_gen: v7x
topology: tpu7x:2x2x1
jax: 0.10.0
libtpu: 0.0.40
codegen_flags: <defaults>
</compile_context>

<pallas_src>
import numpy as np
import jax
import jax.numpy as jnp
from jax.experimental import pallas as pl
from jax.experimental.pallas import tpu as pltpu

NEG_MASK = -9e15  # same constant as the PyTorch module


def _make_kernel(neg_slope):
    neg_slope = float(neg_slope)

    def kernel(hq_ref, hk_ref, adj_ref, ws_ref, wdt_ref, o_ref):
        # hq_ref : (TB, TI, D)  query-row block of hidden
        # hk_ref : (TB, N,  D)  all key/value rows for the same batches
        # adj_ref: (TB, TI, N)  int8 edge types in {0..4}
        # ws_ref : (D, 4)       a_k[:D]   (applied to h[i]),  k = 0..3
        # wdt_ref: (4, D)       a_k[D:]^T (applied to h[j]),  k = 0..3
        # o_ref  : (TB, TI, D)
        hq = hq_ref[...].astype(jnp.float32)
        hk = hk_ref[...].astype(jnp.float32)
        # int8 on the wire (4x less DMA); widen once in VMEM for native 32-bit compares.
        adj = adj_ref[...].astype(jnp.int32)

        TB = hq.shape[0]
        D = hq.shape[2]
        w_src = jnp.broadcast_to(ws_ref[...], (TB, D, 4))       # tiny
        w_dst_t = jnp.broadcast_to(wdt_ref[...], (TB, 4, D))    # tiny

        # u[b,i,k] = hq[b,i] @ a_k[:D]   -> (TB, TI, 4)
        u = jnp.einsum('bid,bdk->bik', hq, w_src,
                       preferred_element_type=jnp.float32)
        # vt[b,k,j] = hk[b,j] @ a_k[D:]  -> (TB, 4, N)  (j lands on the lane dim)
        vt = jnp.einsum('bkd,bjd->bkj', w_dst_t, hk,
                        preferred_element_type=jnp.float32)

        # Edge-type select tree: adj in {1..4} -> column 0..3; adj == 0 -> masked.
        valid = adj > 0
        sel_odd = (adj == 2) | (adj == 4)   # columns 1, 3
        sel_hi = adj >= 3                   # columns 2, 3

        u0, u1, u2, u3 = (u[:, :, k:k + 1] for k in range(4))    # each (TB, TI, 1)
        v0, v1, v2, v3 = (vt[:, k:k + 1, :] for k in range(4))   # each (TB, 1, N)

        u_sel = jnp.where(sel_hi,
                          jnp.where(sel_odd, u3, u2),
                          jnp.where(sel_odd, u1, u0))
        v_sel = jnp.where(sel_hi,
                          jnp.where(sel_odd, v3, v2),
                          jnp.where(sel_odd, v1, v0))
        logit = u_sel + v_sel
        e = jnp.where(logit >= 0, logit, neg_slope * logit)      # LeakyReLU, applied once
        scores = jnp.where(valid, e, NEG_MASK)                   # (TB, TI, N)

        # Numerically-stable softmax, left un-normalized (divide after the matmul).
        m = jnp.max(scores, axis=-1, keepdims=True)
        p = jnp.exp(scores - m)
        s = jnp.sum(p, axis=-1, keepdims=True)

        # output rows = (p @ h) / s : matmul on the MXU in bf16 with f32 accumulation,
        # then N*D scaling with the (cheap, EUP-slot) approximate reciprocal.
        o = jnp.einsum('bij,bjd->bid',
                       p.astype(jnp.bfloat16), hk.astype(jnp.bfloat16),
                       preferred_element_type=jnp.float32)
        inv = pl.reciprocal(s, approx=True)
        o_ref[...] = (o * inv).astype(o_ref.dtype)

    return kernel


def _choose_tiles(B, N, D):
    """Pick (TB = batches per grid step, TI = query rows per grid step)."""
    def step_bytes(tb, ti):
        hq = tb * ti * D * 4
        hk = tb * N * D * 4
        ad = tb * ti * N            # int8 adjacency block
        out = tb * ti * D * 4
        tmp = 4 * tb * ti * N * 4   # scores / p / select temporaries (f32)
        return 2 * (hq + hk + ad + out) + tmp   # inputs & outputs double-buffered

    budget = 24 * 1024 * 1024   # leave headroom under v7x's 64 MiB physical VMEM

    TI = N
    if step_bytes(1, N) > budget:
        # multiples of 32 keep the int8 sublane tiling happy; pick the largest that fits
        divisors = [t for t in (1024, 512, 256, 128, 64, 32) if t < N and N % t == 0]
        fitting = [t for t in divisors if step_bytes(1, t) <= budget]
        if fitting:
            TI = fitting[0]
        elif divisors:
            TI = divisors[-1]
        # else: keep TI = N (oddly-shaped N; still correct, just a bigger block)

    # Pack batches per step to amortize the ~0.35us/step pipeline overhead at small N.
    TB = 1
    while (TB * 2 <= 32 and B % (TB * 2) == 0
           and step_bytes(TB * 2, TI) <= budget):
        TB *= 2
    return TB, TI


def local_aggregator_mix(hidden, adj, a_0, a_1, a_2, a_3, neg_slope):
    """Pallas implementation of LocalAggregator_mix.forward."""
    B, N, D = hidden.shape

    # Edge types fit in int8 -> 4x less HBM traffic on the dominant (B, N, N) array.
    adj8 = adj.astype(jnp.int8)

    # Stack the four attention vectors, split into the half applied to h[i] and the
    # half applied to h[j]; transpose the latter here so the kernel never transposes
    # anything of size (N, D).
    w = jnp.concatenate([a_0, a_1, a_2, a_3], axis=-1).astype(jnp.float32)  # (2D, 4)
    w_src = w[:D, :]          # (D, 4)
    w_dst_t = w[D:, :].T      # (4, D)

    TB, TI = _choose_tiles(B, N, D)
    grid = (B // TB, N // TI)

    cost = pl.CostEstimate(
        flops=2 * B * N * N * D + 2 * B * N * D * 8,
        transcendentals=B * N * N,
        bytes_accessed=B * N * N + 3 * B * N * D * 4 + 2 * 4 * D * 4,
    )

    kernel = _make_kernel(neg_slope)
    out = pl.pallas_call(
        kernel,
        out_shape=jax.ShapeDtypeStruct((B, N, D), hidden.dtype),
        grid_spec=pltpu.PrefetchScalarGridSpec(
            num_scalar_prefetch=0,
            grid=grid,
            in_specs=[
                pl.BlockSpec((TB, TI, D), lambda b, i: (b, i, 0)),  # query rows
                pl.BlockSpec((TB, N, D), lambda b, i: (b, 0, 0)),   # key/value rows
                pl.BlockSpec((TB, TI, N), lambda b, i: (b, i, 0)),  # adj (int8)
                pl.BlockSpec((D, 4), lambda b, i: (0, 0)),          # w_src
                pl.BlockSpec((4, D), lambda b, i: (0, 0)),          # w_dst_t
            ],
            out_specs=pl.BlockSpec((TB, TI, D), lambda b, i: (b, i, 0)),
        ),
        compiler_params=pltpu.CompilerParams(
            dimension_semantics=("parallel", "parallel"),
            vmem_limit_bytes=64 * 1024 * 1024),
        cost_estimate=cost,
    )(hidden, hidden, adj8, w_src, w_dst_t)
    return out


def reference(hidden, adj, a_0, a_1, a_2, a_3, neg_slope):
    """Pure-JAX reference mirroring the PyTorch forward exactly (f32)."""
    B, N, D = hidden.shape
    hi = jnp.broadcast_to(hidden[:, :, None, :], (B, N, N, D))
    hj = jnp.broadcast_to(hidden[:, None, :, :], (B, N, N, D))
    a_input = jnp.concatenate([hi, hj], axis=-1)           # (B, N, N, 2D)

    def lrelu(x):
        return jnp.where(x >= 0, x, neg_slope * x)

    e = [lrelu(jnp.squeeze(a_input @ a_k, -1)) for a_k in (a_0, a_1, a_2, a_3)]
    mask = jnp.full_like(e[0], NEG_MASK)
    alpha = jnp.where(adj == 1, e[0], mask)
    alpha = jnp.where(adj == 2, e[1], alpha)
    alpha = jnp.where(adj == 3, e[2], alpha)
    alpha = jnp.where(adj == 4, e[3], alpha)
    alpha = jax.nn.softmax(alpha, axis=-1)
    return alpha @ hidden


if __name__ == "__main__":
    B, N, D = 2, 8, 32
    neg_slope = 0.2   # LeakyReLU alpha

    key = jax.random.PRNGKey(0)
    k_h, k_adj, k0, k1, k2, k3 = jax.random.split(key, 6)

    hidden = jax.random.normal(k_h, (B, N, D), dtype=jnp.float32)
    adj = jax.random.randint(k_adj, (B, N, N), 0, 5, dtype=jnp.int32)

    # Deterministic parameter init (shapes from __init__: (2*dim, 1) each).
    std = 1.0 / np.sqrt(2 * D)
    a_0 = jax.random.normal(k0, (2 * D, 1), dtype=jnp.float32) * std
    a_1 = jax.random.normal(k1, (2 * D, 1), dtype=jnp.float32) * std
    a_2 = jax.random.normal(k2, (2 * D, 1), dtype=jnp.float32) * std
    a_3 = jax.random.normal(k3, (2 * D, 1), dtype=jnp.float32) * std
    bias = jnp.zeros((D,), dtype=jnp.float32)  # declared in __init__ but unused in forward

    out = local_aggregator_mix(hidden, adj, a_0, a_1, a_2, a_3, neg_slope)
    out = jax.block_until_ready(out)

    ref = reference(hidden, adj, a_0, a_1, a_2, a_3, neg_slope)
    # bf16 MXU matmul + approximate reciprocal => loosened tolerance vs the f32 reference.
    np.testing.assert_allclose(np.asarray(out), np.asarray(ref),
                               rtol=2e-2, atol=2e-2)
    print("KERNEL_OK")
</pallas_src>

<mosaic_0001>
module attributes {stable_mosaic.version = 11 : i64} {
  func.func @kernel(%arg0: i32, %arg1: i32, %arg2: memref<2x8x32xf32, #tpu.memory_space<vmem>>, %arg3: memref<2x8x32xf32, #tpu.memory_space<vmem>>, %arg4: memref<2x8x8xi8, #tpu.memory_space<vmem>>, %arg5: memref<32x4xf32, #tpu.memory_space<vmem>>, %arg6: memref<4x32xf32, #tpu.memory_space<vmem>>, %arg7: memref<2x8x32xf32, #tpu.memory_space<vmem>>) attributes {dimension_semantics = [#tpu.dimension_semantics<parallel>, #tpu.dimension_semantics<parallel>], iteration_bounds = array<i64: 1, 1>, scalar_prefetch = 0 : i64, scratch_operands = 0 : i64, tpu.core_type = #tpu.core_type<tc>, window_params = [{transform_indices = @transform_0, window_bounds = array<i64: 2, 8, 32>}, {transform_indices = @transform_1, window_bounds = array<i64: 2, 8, 32>}, {transform_indices = @transform_2, window_bounds = array<i64: 2, 8, 8>}, {pipeline_mode = #tpu.pipeline_mode<synchronous>, transform_indices = @transform_3, window_bounds = array<i64: 32, 4>}, {pipeline_mode = #tpu.pipeline_mode<synchronous>, transform_indices = @transform_4, window_bounds = array<i64: 4, 32>}, {transform_indices = @transform_5, window_bounds = array<i64: 2, 8, 32>}]} {
    %c0 = arith.constant 0 : index
    %c0_0 = arith.constant 0 : index
    %c0_1 = arith.constant 0 : index
    %0 = vector.load %arg2[%c0, %c0_0, %c0_1] : memref<2x8x32xf32, #tpu.memory_space<vmem>>, vector<2x8x32xf32>
    %c0_2 = arith.constant 0 : index
    %c0_3 = arith.constant 0 : index
    %c0_4 = arith.constant 0 : index
    %1 = vector.load %arg3[%c0_2, %c0_3, %c0_4] : memref<2x8x32xf32, #tpu.memory_space<vmem>>, vector<2x8x32xf32>
    %c0_5 = arith.constant 0 : index
    %c0_6 = arith.constant 0 : index
    %c0_7 = arith.constant 0 : index
    %2 = vector.load %arg4[%c0_5, %c0_6, %c0_7] : memref<2x8x8xi8, #tpu.memory_space<vmem>>, vector<2x8x8xi8>
    %3 = arith.extsi %2 : vector<2x8x8xi8> to vector<2x8x8xi32>
    %c0_8 = arith.constant 0 : index
    %c0_9 = arith.constant 0 : index
    %4 = vector.load %arg5[%c0_8, %c0_9] : memref<32x4xf32, #tpu.memory_space<vmem>>, vector<32x4xf32>
    %5 = vector.shape_cast %4 : vector<32x4xf32> to vector<1x32x4xf32>
    %6 = vector.broadcast %5 : vector<1x32x4xf32> to vector<2x32x4xf32>
    %c0_10 = arith.constant 0 : index
    %c0_11 = arith.constant 0 : index
    %7 = vector.load %arg6[%c0_10, %c0_11] : memref<4x32xf32, #tpu.memory_space<vmem>>, vector<4x32xf32>
    %8 = vector.shape_cast %7 : vector<4x32xf32> to vector<1x4x32xf32>
    %9 = vector.broadcast %8 : vector<1x4x32xf32> to vector<2x4x32xf32>
    "tpu.trace_start"() <{level = 10 : i32, message = "bid,bdk->bik"}> : () -> ()
    %cst = arith.constant dense<0.000000e+00> : vector<2x8x4xf32>
    %10 = tpu.matmul %0, %6, %cst {dimension_numbers = #tpu.dot_dimension_numbers<[2], [1], [1], [2], [0, 0, 0, 1, 1, 2], [0], [0]>} : vector<2x8x32xf32>, vector<2x32x4xf32>, vector<2x8x4xf32> -> vector<2x8x4xf32>
    "tpu.trace_stop"() : () -> ()
    "tpu.trace_start"() <{level = 10 : i32, message = "bkd,bjd->bkj"}> : () -> ()
    %cst_12 = arith.constant dense<0.000000e+00> : vector<2x4x8xf32>
    %11 = tpu.matmul %9, %1, %cst_12 {dimension_numbers = #tpu.dot_dimension_numbers<[2], [2], [1], [1], [0, 0, 0, 1, 1, 1], [0], [0]>} : vector<2x4x32xf32>, vector<2x8x32xf32>, vector<2x4x8xf32> -> vector<2x4x8xf32>
    %c0_i32 = arith.constant 0 : i32
    "tpu.trace_stop"() : () -> ()
    %12 = vector.broadcast %c0_i32 : i32 to vector<2x8x8xi32>
    %13 = arith.cmpi sgt, %3, %12 : vector<2x8x8xi32>
    %c2_i32 = arith.constant 2 : i32
    %14 = vector.broadcast %c2_i32 : i32 to vector<2x8x8xi32>
    %15 = arith.cmpi eq, %3, %14 : vector<2x8x8xi32>
    %c4_i32 = arith.constant 4 : i32
    %16 = vector.broadcast %c4_i32 : i32 to vector<2x8x8xi32>
    %17 = arith.cmpi eq, %3, %16 : vector<2x8x8xi32>
    %18 = arith.ori %15, %17 : vector<2x8x8xi1>
    %c3_i32 = arith.constant 3 : i32
    %19 = vector.broadcast %c3_i32 : i32 to vector<2x8x8xi32>
    %20 = arith.cmpi sge, %3, %19 : vector<2x8x8xi32>
    %21 = vector.extract_strided_slice %10 {offsets = [0, 0, 0], sizes = [2, 8, 1], strides = [1, 1, 1]} : vector<2x8x4xf32> to vector<2x8x1xf32>
    %22 = vector.extract_strided_slice %10 {offsets = [0, 0, 1], sizes = [2, 8, 1], strides = [1, 1, 1]} : vector<2x8x4xf32> to vector<2x8x1xf32>
    %23 = vector.extract_strided_slice %10 {offsets = [0, 0, 2], sizes = [2, 8, 1], strides = [1, 1, 1]} : vector<2x8x4xf32> to vector<2x8x1xf32>
    %24 = vector.extract_strided_slice %10 {offsets = [0, 0, 3], sizes = [2, 8, 1], strides = [1, 1, 1]} : vector<2x8x4xf32> to vector<2x8x1xf32>
    %25 = vector.extract_strided_slice %11 {offsets = [0, 0, 0], sizes = [2, 1, 8], strides = [1, 1, 1]} : vector<2x4x8xf32> to vector<2x1x8xf32>
    %26 = vector.extract_strided_slice %11 {offsets = [0, 1, 0], sizes = [2, 1, 8], strides = [1, 1, 1]} : vector<2x4x8xf32> to vector<2x1x8xf32>
    %27 = vector.extract_strided_slice %11 {offsets = [0, 2, 0], sizes = [2, 1, 8], strides = [1, 1, 1]} : vector<2x4x8xf32> to vector<2x1x8xf32>
    %28 = vector.extract_strided_slice %11 {offsets = [0, 3, 0], sizes = [2, 1, 8], strides = [1, 1, 1]} : vector<2x4x8xf32> to vector<2x1x8xf32>
    %29 = vector.shape_cast %24 : vector<2x8x1xf32> to vector<2x8x1xf32>
    %30 = vector.broadcast %29 : vector<2x8x1xf32> to vector<2x8x8xf32>
    %31 = vector.shape_cast %23 : vector<2x8x1xf32> to vector<2x8x1xf32>
    %32 = vector.broadcast %31 : vector<2x8x1xf32> to vector<2x8x8xf32>
    %33 = arith.select %18, %30, %32 : vector<2x8x8xi1>, vector<2x8x8xf32>
    %34 = vector.shape_cast %22 : vector<2x8x1xf32> to vector<2x8x1xf32>
    %35 = vector.broadcast %34 : vector<2x8x1xf32> to vector<2x8x8xf32>
    %36 = vector.shape_cast %21 : vector<2x8x1xf32> to vector<2x8x1xf32>
    %37 = vector.broadcast %36 : vector<2x8x1xf32> to vector<2x8x8xf32>
    %38 = arith.select %18, %35, %37 : vector<2x8x8xi1>, vector<2x8x8xf32>
    %39 = arith.select %20, %33, %38 : vector<2x8x8xi1>, vector<2x8x8xf32>
    %40 = vector.shape_cast %28 : vector<2x1x8xf32> to vector<2x1x8xf32>
    %41 = vector.broadcast %40 : vector<2x1x8xf32> to vector<2x8x8xf32>
    %42 = vector.shape_cast %27 : vector<2x1x8xf32> to vector<2x1x8xf32>
    %43 = vector.broadcast %42 : vector<2x1x8xf32> to vector<2x8x8xf32>
    %44 = arith.select %18, %41, %43 : vector<2x8x8xi1>, vector<2x8x8xf32>
    %45 = vector.shape_cast %26 : vector<2x1x8xf32> to vector<2x1x8xf32>
    %46 = vector.broadcast %45 : vector<2x1x8xf32> to vector<2x8x8xf32>
    %47 = vector.shape_cast %25 : vector<2x1x8xf32> to vector<2x1x8xf32>
    %48 = vector.broadcast %47 : vector<2x1x8xf32> to vector<2x8x8xf32>
    %49 = arith.select %18, %46, %48 : vector<2x8x8xi1>, vector<2x8x8xf32>
    %50 = arith.select %20, %44, %49 : vector<2x8x8xi1>, vector<2x8x8xf32>
    %51 = arith.addf %39, %50 : vector<2x8x8xf32>
    %cst_13 = arith.constant 0.000000e+00 : f32
    %52 = vector.broadcast %cst_13 : f32 to vector<2x8x8xf32>
    %53 = arith.cmpf oge, %51, %52 : vector<2x8x8xf32>
    %cst_14 = arith.constant 2.000000e-01 : f32
    %54 = vector.broadcast %cst_14 : f32 to vector<2x8x8xf32>
    %55 = arith.mulf %54, %51 : vector<2x8x8xf32>
    %56 = arith.select %53, %51, %55 : vector<2x8x8xi1>, vector<2x8x8xf32>
    %cst_15 = arith.constant -9.000000e+15 : f32
    %57 = vector.broadcast %cst_15 : f32 to vector<2x8x8xf32>
    %58 = arith.select %13, %56, %57 : vector<2x8x8xi1>, vector<2x8x8xf32>
    %cst_16 = arith.constant dense<0xFF800000> : vector<2x8xf32>
    %59 = vector.multi_reduction <maximumf>, %58, %cst_16 [2] : vector<2x8x8xf32> to vector<2x8xf32>
    %60 = vector.shape_cast %59 : vector<2x8xf32> to vector<2x8x1xf32>
    %61 = vector.broadcast %60 : vector<2x8x1xf32> to vector<2x8x8xf32>
    %62 = arith.subf %58, %61 : vector<2x8x8xf32>
    %63 = math.exp %62 : vector<2x8x8xf32>
    %cst_17 = arith.constant dense<0.000000e+00> : vector<2x8xf32>
    %64 = vector.multi_reduction <add>, %63, %cst_17 [2] : vector<2x8x8xf32> to vector<2x8xf32>
    %65 = vector.shape_cast %64 : vector<2x8xf32> to vector<2x8x1xf32>
    %66 = arith.truncf %63 : vector<2x8x8xf32> to vector<2x8x8xbf16>
    %67 = arith.truncf %1 : vector<2x8x32xf32> to vector<2x8x32xbf16>
    "tpu.trace_start"() <{level = 10 : i32, message = "bij,bjd->bid"}> : () -> ()
    %cst_18 = arith.constant dense<0.000000e+00> : vector<2x8x32xf32>
    %68 = tpu.matmul %66, %67, %cst_18 {dimension_numbers = #tpu.dot_dimension_numbers<[2], [1], [1], [2], [0, 0, 0, 1, 1, 2], [0], [0]>} : vector<2x8x8xbf16>, vector<2x8x32xbf16>, vector<2x8x32xf32> -> vector<2x8x32xf32>
    "tpu.trace_stop"() : () -> ()
    %69 = tpu.reciprocal %65 {approx = true} : vector<2x8x1xf32> -> vector<2x8x1xf32>
    %70 = vector.broadcast %69 : vector<2x8x1xf32> to vector<2x8x32xf32>
    %71 = arith.mulf %68, %70 : vector<2x8x32xf32>
    %c0_19 = arith.constant 0 : index
    %c0_20 = arith.constant 0 : index
    %c0_21 = arith.constant 0 : index
    %72 = vector.load %arg7[%c0_19, %c0_20, %c0_21] : memref<2x8x32xf32, #tpu.memory_space<vmem>>, vector<2x8x32xf32>
    tpu.vector_store %arg7[%c0_19, %c0_20, %c0_21], %71 {strides = array<i32>} : memref<2x8x32xf32, #tpu.memory_space<vmem>>, vector<2x8x32xf32>,
    return
  }
  func.func @transform_0(%arg0: i32, %arg1: i32) -> (i32, i32, i32) {
    %c0_i32 = arith.constant 0 : i32
    %c0_i32_0 = arith.constant 0 : i32
    return %arg0, %arg1, %c0_i32 : i32, i32, i32
  }
  func.func @transform_1(%arg0: i32, %arg1: i32) -> (i32, i32, i32) {
    %c0_i32 = arith.constant 0 : i32
    %c0_i32_0 = arith.constant 0 : i32
    %c0_i32_1 = arith.constant 0 : i32
    return %arg0, %c0_i32, %c0_i32_0 : i32, i32, i32
  }
  func.func @transform_2(%arg0: i32, %arg1: i32) -> (i32, i32, i32) {
    %c0_i32 = arith.constant 0 : i32
    %c0_i32_0 = arith.constant 0 : i32
    return %arg0, %arg1, %c0_i32 : i32, i32, i32
  }
  func.func @transform_3(%arg0: i32, %arg1: i32) -> (i32, i32) {
    %c0_i32 = arith.constant 0 : i32
    %c0_i32_0 = arith.constant 0 : i32
    %c0_i32_1 = arith.constant 0 : i32
    return %c0_i32, %c0_i32_0 : i32, i32
  }
  func.func @transform_4(%arg0: i32, %arg1: i32) -> (i32, i32) {
    %c0_i32 = arith.constant 0 : i32
    %c0_i32_0 = arith.constant 0 : i32
    %c0_i32_1 = arith.constant 0 : i32
    return %c0_i32, %c0_i32_0 : i32, i32
  }
  func.func @transform_5(%arg0: i32, %arg1: i32) -> (i32, i32, i32) {
    %c0_i32 = arith.constant 0 : i32
    %c0_i32_0 = arith.constant 0 : i32
    return %arg0, %arg1, %c0_i32 : i32, i32, i32
  }
}

</mosaic_0001>

<llo_original>
// kernel: tpu_custom_call.1
$region0: #{tpu_custom_call.1}
  #allocation0 [shape = 'u32[]', space=smem, size = 0x4, offset = 0x4, fixed_abs, tag = 'smem constant byte address 0x4 - core index']
  #allocation1 [shape = 'u32[144,128]{1,0:T(1,128)}', space=vmem, size = 0x12000, scoped, tag = 'internal scratch']
  %s0 = inlined_call_operand.hbm [shape: f32[2,8,32], index: 0, kind: input, shape index: {}]
  %s1 = inlined_call_operand.hbm [shape: f32[2,8,32], index: 1, kind: input, shape index: {}]
  %s2 = inlined_call_operand.hbm [shape: s8[2,8,8], index: 2, kind: input, shape index: {}]
  %s3 = inlined_call_operand.hbm [shape: f32[32,4], index: 3, kind: input, shape index: {}]
  %s4 = inlined_call_operand.hbm [shape: f32[4,32], index: 4, kind: input, shape index: {}]
  %s5 = inlined_call_operand.hbm [shape: f32[2,8,32], index: 5, kind: output, shape index: {}]
  %s6 = sld [smem:[#allocation0]]
  $region50: #{tpu_custom_call.1} parent=0
    _
  %s8 = ssub.s32 1, %s6
  %s9 = scalar_select 0, %s8, %s6
  $region1: #{tpu_custom_call.1} parent=0
    #allocation2 [shape = 'u8[8192]{0}', space=vmem, size = 0x2000, scoped, tag = 'input window, operand 0, single buffered']
    #allocation3 [shape = 's32[1]{0}', space=sflag, size = 0x4, scoped, tag = 'scoped memory for tpu_custom_call.1']
    #allocation4 [shape = 's32[1]{0}', space=sflag, size = 0x4, scoped, tag = 'scoped memory for tpu_custom_call.1']
    #allocation5 [shape = 'u8[8192]{0}', space=vmem, size = 0x2000, scoped, tag = 'input window, operand 1, single buffered']
    #allocation6 [shape = 's32[1]{0}', space=sflag, size = 0x4, scoped, tag = 'scoped memory for tpu_custom_call.1']
    #allocation7 [shape = 'u8[2048]{0}', space=vmem, size = 0x800, scoped, tag = 'input window, operand 2, single buffered']
    #allocation8 [shape = 'u8[16384]{0}', space=vmem, size = 0x4000, scoped, tag = 'input window, operand 3, single buffered']
    #allocation9 [shape = 's32[1]{0}', space=sflag, size = 0x4, scoped, tag = 'scoped memory for tpu_custom_call.1']
    #allocation10 [shape = 'u8[2048]{0}', space=vmem, size = 0x800, scoped, tag = 'input window, operand 4, single buffered']
    #allocation11 [shape = 'u8[8192]{0}', space=vmem, size = 0x2000, scoped, tag = 'output window, operand 0, single buffered']
    %10 = vsyncpa [#allocation3], 0
    %11 = vsyncpa [#allocation6], 0
    %12 = vsyncpa [#allocation9], 0
    %13 = vsyncpa [#allocation4], 0
    // Predicated region
    $region2: #{tpu_custom_call.1} parent=1 // pred_check
      _
    $region3: #{tpu_custom_call.1} parent=1 // pred_check_branch
      %15 = sbr.rel (0) target = $region5
    $region4: #{tpu_custom_call.1} parent=1 // pred_region
      %s17 = ssub.s32 256, 256
      %18 = vsyncadd [#allocation3], %s17
      %s19 = sshll.u32 [#allocation2], 4
      %s20 = int_to_ptr.vmem [resolvable:$true] %s19
      %25 = dma.hbm_to_vmem [thread:$0]  %s0, 256, %s20, [#allocation3], 128, 128, 8
    $region5: #{tpu_custom_call.1} parent=1 // pred_fallthru
      _
    // Predicated region
    $region6: #{tpu_custom_call.1} parent=1 // pred_check
      _
    $region7: #{tpu_custom_call.1} parent=1 // pred_check_branch
      %27 = sbr.rel (0) target = $region9
    $region8: #{tpu_custom_call.1} parent=1 // pred_region
      %s29 = ssub.s32 256, 256
      %30 = vsyncadd [#allocation6], %s29
      %s31 = sshll.u32 [#allocation5], 4
      %s32 = int_to_ptr.vmem [resolvable:$true] %s31
      %37 = dma.hbm_to_vmem [thread:$0]  %s1, 256, %s32, [#allocation6], 128, 128, 8
    $region9: #{tpu_custom_call.1} parent=1 // pred_fallthru
      _
    // Predicated region
    $region10: #{tpu_custom_call.1} parent=1 // pred_check
      _
    $region11: #{tpu_custom_call.1} parent=1 // pred_check_branch
      %39 = sbr.rel (0) target = $region13
    $region12: #{tpu_custom_call.1} parent=1 // pred_region
      %s41 = ssub.s32 64, 64
      %42 = vsyncadd [#allocation6], %s41
      %s43 = sshll.u32 [#allocation7], 4
      %s44 = int_to_ptr.vmem [resolvable:$true] %s43
      %49 = dma.hbm_to_vmem [thread:$0]  %s2, 64, %s44, [#allocation6], 32, 32, 2
    $region13: #{tpu_custom_call.1} parent=1 // pred_fallthru
      _
    // Predicated region
    $region14: #{tpu_custom_call.1} parent=1 // pred_check
      _
    $region15: #{tpu_custom_call.1} parent=1 // pred_check_branch
      %51 = sbr.rel (0) target = $region17
    $region16: #{tpu_custom_call.1} parent=1 // pred_region
      %s53 = ssub.s32 512, 512
      %54 = vsyncadd [#allocation9], %s53
      %s55 = sshll.u32 [#allocation8], 4
      %s56 = int_to_ptr.vmem [resolvable:$true] %s55
      %61 = dma.hbm_to_vmem [thread:$0]  %s3, 512, %s56, [#allocation9], 128, 128, 8
    $region17: #{tpu_custom_call.1} parent=1 // pred_fallthru
      _
    // Predicated region
    $region18: #{tpu_custom_call.1} parent=1 // pred_check
      _
    $region19: #{tpu_custom_call.1} parent=1 // pred_check_branch
      %63 = sbr.rel (0) target = $region21
    $region20: #{tpu_custom_call.1} parent=1 // pred_region
      %s65 = ssub.s32 64, 64
      %66 = vsyncadd [#allocation9], %s65
      %s68 = sshll.u32 [#allocation10], 4
      %s69 = int_to_ptr.vmem [resolvable:$true] %s68
      %71 = dma.hbm_to_vmem [thread:$0]  %s4, 64, %s69, [#allocation9]
    $region21: #{tpu_custom_call.1} parent=1 // pred_fallthru
      _
    // Predicated region
    $region22: #{tpu_custom_call.1} parent=1 // pred_check
      _
    $region23: #{tpu_custom_call.1} parent=1 // pred_check_branch
      %73 = sbr.rel (0) target = $region25
    $region24: #{tpu_custom_call.1} parent=1 // pred_region
      %74 = dma.done [#allocation3], 256
    $region25: #{tpu_custom_call.1} parent=1 // pred_fallthru
      _
    // Predicated region
    $region26: #{tpu_custom_call.1} parent=1 // pred_check
      _
    $region27: #{tpu_custom_call.1} parent=1 // pred_check_branch
      %76 = sbr.rel (0) target = $region29
    $region28: #{tpu_custom_call.1} parent=1 // pred_region
      %77 = dma.done [#allocation6], 256
    $region29: #{tpu_custom_call.1} parent=1 // pred_fallthru
      _
    // Predicated region
    $region30: #{tpu_custom_call.1} parent=1 // pred_check
      _
    $region31: #{tpu_custom_call.1} parent=1 // pred_check_branch
      %79 = sbr.rel (0) target = $region33
    $region32: #{tpu_custom_call.1} parent=1 // pred_region
      %80 = dma.done [#allocation6], 64
    $region33: #{tpu_custom_call.1} parent=1 // pred_fallthru
      _
    // Predicated region
    $region34: #{tpu_custom_call.1} parent=1 // pred_check
      _
    $region35: #{tpu_custom_call.1} parent=1 // pred_check_branch
      %82 = sbr.rel (0) target = $region37
    $region36: #{tpu_custom_call.1} parent=1 // pred_region
      %83 = dma.done [#allocation9], 512
    $region37: #{tpu_custom_call.1} parent=1 // pred_fallthru
      _
    // Predicated region
    $region38: #{tpu_custom_call.1} parent=1 // pred_check
      _
    $region39: #{tpu_custom_call.1} parent=1 // pred_check_branch
      %85 = sbr.rel (0) target = $region41
    $region40: #{tpu_custom_call.1} parent=1 // pred_region
      %86 = dma.done [#allocation9], 64
    $region41: #{tpu_custom_call.1} parent=1 // pred_fallthru
      _
    %v88 = vld [vmem:[#allocation2] sm:$0xff]
    %v89 = vld [vmem:[#allocation2 + $0x8] sm:$0xff]
    %v90 = vld [vmem:[#allocation5] sm:$0xff]
    %v91 = vld [vmem:[#allocation5 + $0x8] sm:$0xff]
    %v92 = vld [vmem:[#allocation7] sm:$0x3]
    %v93 = vld [vmem:[#allocation7 + $0x2] sm:$0x3]
    %v94 = vunpack.c.0.s8 %v92
    %v95 = vunpack.c.0.s8 %v93
    %v96 = vld [vmem:[#allocation8] sm:$0xff]
    %v97 = vld [vmem:[#allocation8 + $0x8] sm:$0xff]
    %v98 = vld [vmem:[#allocation8 + $0x10] sm:$0xff]
    %v99 = vld [vmem:[#allocation8 + $0x18] sm:$0xff]
    %v100 = vld [vmem:[#allocation10] sm:$0xf]
    %vm101 = vcmask 261120
    %v103 = vsel %vm101, %v88, 0
    %105 = vmatprep.subr.mxu0 0.0
    %106 = vmatpush1.msra.mxu0 %v96
    %107 = vmatprep.subr.mxu0 0.0
    %108 = vmatpush1.msra.mxu0 %v97
    %109 = vmatprep.subr.mxu0 0.0
    %110 = vmatpush1.msra.mxu0 %v98
    %111 = vmatprep.subr.mxu0 0.0
    %112 = vmatpush1.msra.mxu0 %v99
    %113 = vmatprep.subr.mxu0 0.0
    %114 = vmatpush1.msra.mxu0 0.0
    %115 = vmatprep.subr.mxu0 0.0
    %116 = vmatpush1.msra.mxu0 0.0
    %117 = vmatprep.subr.mxu0 0.0
    %118 = vmatpush1.msra.mxu0 0.0
    %119 = vmatprep.subr.mxu0 0.0
    %120 = vmatpush1.msra.mxu0 0.0
    %121 = vmatprep.subr.mxu0 0.0
    %122 = vmatpush1.msra.mxu0 0.0
    %123 = vmatprep.subr.mxu0 0.0
    %124 = vmatpush1.msra.mxu0 0.0
    %125 = vmatprep.subr.mxu0 0.0
    %126 = vmatpush1.msra.mxu0 0.0
    %127 = vmatprep.subr.mxu0 0.0
    %128 = vmatpush1.msra.mxu0 0.0
    %129 = vmatprep.subr.mxu0 0.0
    %130 = vmatpush1.msra.mxu0 0.0
    %131 = vmatprep.subr.mxu0 0.0
    %132 = vmatpush1.msra.mxu0 0.0
    %133 = vmatprep.subr.mxu0 0.0
    %134 = vmatpush1.msra.mxu0 0.0
    %135 = vmatprep.subr.mxu0 0.0
    %136 = vmatpush1.msra.mxu0 0.0
    %137 = vmatprep.subr.mxu0 0.0
    %138 = vmatpush1.msra.mxu0 0.0
    %139 = vmatprep.subr.mxu0 0.0
    %140 = vmatpush1.msra.mxu0 0.0
    %141 = vmatprep.subr.mxu0 0.0
    %142 = vmatpush1.msra.mxu0 0.0
    %143 = vmatprep.subr.mxu0 0.0
    %144 = vmatpush1.msra.mxu0 0.0
    %145 = vmatprep.subr.mxu0 0.0
    %146 = vmatpush1.msra.mxu0 0.0
    %147 = vmatprep.subr.mxu0 0.0
    %148 = vmatpush1.msra.mxu0 0.0
    %149 = vmatprep.subr.mxu0 0.0
    %150 = vmatpush1.msra.mxu0 0.0
    %151 = vmatprep.subr.mxu0 0.0
    %152 = vmatpush1.msra.mxu0 0.0
    %153 = vmatprep.subr.mxu0 0.0
    %154 = vmatpush1.msra.mxu0 0.0
    %155 = vmatprep.subr.mxu0 0.0
    %156 = vmatpush1.msra.mxu0 0.0
    %157 = vmatprep.subr.mxu0 0.0
    %158 = vmatpush1.msra.mxu0 0.0
    %159 = vmatprep.subr.mxu0 0.0
    %160 = vmatpush1.msra.mxu0 0.0
    %161 = vmatprep.subr.mxu0 0.0
    %162 = vmatpush1.msra.mxu0 0.0
    %163 = vmatprep.subr.mxu0 0.0
    %164 = vmatpush1.msra.mxu0 0.0
    %165 = vmatprep.subr.mxu0 0.0
    %166 = vmatpush1.msra.mxu0 0.0
    %167 = vmatprep.subr.mxu0 0.0
    %168 = vmatpush1.msra.mxu0 0.0
    %169 = vmatprep.mubr.f32.mxu0 0.0
    %170 = vmatmul.mubr.f32.gmra.mrb[0].mxu0 %v103
    %v171 = vpop.f32.mrb[0].mxu0
    %v172 = vadd.f32 0.0, %v171
    %v173 = vpop.f32.mrb[0].mxu0
    %174 = vdwg.mxu0
    %v176 = vsel %vm101, %v89, 0
    %178 = vmatprep.subr.mxu0 0.0
    %179 = vmatpush1.msra.mxu0 %v96
    %180 = vmatprep.subr.mxu0 0.0
    %181 = vmatpush1.msra.mxu0 %v97
    %182 = vmatprep.subr.mxu0 0.0
    %183 = vmatpush1.msra.mxu0 %v98
    %184 = vmatprep.subr.mxu0 0.0
    %185 = vmatpush1.msra.mxu0 %v99
    %186 = vmatprep.subr.mxu0 0.0
    %187 = vmatpush1.msra.mxu0 0.0
    %188 = vmatprep.subr.mxu0 0.0
    %189 = vmatpush1.msra.mxu0 0.0
    %190 = vmatprep.subr.mxu0 0.0
    %191 = vmatpush1.msra.mxu0 0.0
    %192 = vmatprep.subr.mxu0 0.0
    %193 = vmatpush1.msra.mxu0 0.0
    %194 = vmatprep.subr.mxu0 0.0
    %195 = vmatpush1.msra.mxu0 0.0
    %196 = vmatprep.subr.mxu0 0.0
    %197 = vmatpush1.msra.mxu0 0.0
    %198 = vmatprep.subr.mxu0 0.0
    %199 = vmatpush1.msra.mxu0 0.0
    %200 = vmatprep.subr.mxu0 0.0
    %201 = vmatpush1.msra.mxu0 0.0
    %202 = vmatprep.subr.mxu0 0.0
    %203 = vmatpush1.msra.mxu0 0.0
    %204 = vmatprep.subr.mxu0 0.0
    %205 = vmatpush1.msra.mxu0 0.0
    %206 = vmatprep.subr.mxu0 0.0
    %207 = vmatpush1.msra.mxu0 0.0
    %208 = vmatprep.subr.mxu0 0.0
    %209 = vmatpush1.msra.mxu0 0.0
    %210 = vmatprep.subr.mxu0 0.0
    %211 = vmatpush1.msra.mxu0 0.0
    %212 = vmatprep.subr.mxu0 0.0
    %213 = vmatpush1.msra.mxu0 0.0
    %214 = vmatprep.subr.mxu0 0.0
    %215 = vmatpush1.msra.mxu0 0.0
    %216 = vmatprep.subr.mxu0 0.0
    %217 = vmatpush1.msra.mxu0 0.0
    %218 = vmatprep.subr.mxu0 0.0
    %219 = vmatpush1.msra.mxu0 0.0
    %220 = vmatprep.subr.mxu0 0.0
    %221 = vmatpush1.msra.mxu0 0.0
    %222 = vmatprep.subr.mxu0 0.0
    %223 = vmatpush1.msra.mxu0 0.0
    %224 = vmatprep.subr.mxu0 0.0
    %225 = vmatpush1.msra.mxu0 0.0
    %226 = vmatprep.subr.mxu0 0.0
    %227 = vmatpush1.msra.mxu0 0.0
    %228 = vmatprep.subr.mxu0 0.0
    %229 = vmatpush1.msra.mxu0 0.0
    %230 = vmatprep.subr.mxu0 0.0
    %231 = vmatpush1.msra.mxu0 0.0
    %232 = vmatprep.subr.mxu0 0.0
    %233 = vmatpush1.msra.mxu0 0.0
    %234 = vmatprep.subr.mxu0 0.0
    %235 = vmatpush1.msra.mxu0 0.0
    %236 = vmatprep.subr.mxu0 0.0
    %237 = vmatpush1.msra.mxu0 0.0
    %238 = vmatprep.subr.mxu0 0.0
    %239 = vmatpush1.msra.mxu0 0.0
    %240 = vmatprep.subr.mxu0 0.0
    %241 = vmatpush1.msra.mxu0 0.0
    %242 = vmatprep.mubr.f32.mxu0 0.0
    %243 = vmatmul.mubr.f32.gmra.mrb[0].mxu0 %v176
    %v244 = vpop.f32.mrb[0].mxu0
    %v245 = vadd.f32 0.0, %v244
    %v246 = vpop.f32.mrb[0].mxu0
    %247 = vdwg.mxu0
    %v249 = vsel %vm101, %v100, 0
    %v252 = vsel %vm101, %v90, 0
    %254 = vmatprep.subr.mxu0 0.0
    %255 = vmatpush1.xpose.msra.mxu0 %v252
    %256 = vmatprep.subr.mxu0 0.0
    %257 = vmatpush1.xpose.msra.mxu0 0.0
    %258 = vmatprep.subr.mxu0 0.0
    %259 = vmatpush1.xpose.msra.mxu0 0.0
    %260 = vmatprep.subr.mxu0 0.0
    %261 = vmatpush1.xpose.msra.mxu0 0.0
    %262 = vmatprep.subr.mxu0 0.0
    %263 = vmatpush1.xpose.msra.mxu0 0.0
    %264 = vmatprep.subr.mxu0 0.0
    %265 = vmatpush1.xpose.msra.mxu0 0.0
    %266 = vmatprep.subr.mxu0 0.0
    %267 = vmatpush1.xpose.msra.mxu0 0.0
    %268 = vmatprep.subr.mxu0 0.0
    %269 = vmatpush1.xpose.msra.mxu0 0.0
    %270 = vmatprep.subr.mxu0 0.0
    %271 = vmatpush1.xpose.msra.mxu0 0.0
    %272 = vmatprep.subr.mxu0 0.0
    %273 = vmatpush1.xpose.msra.mxu0 0.0
    %274 = vmatprep.subr.mxu0 0.0
    %275 = vmatpush1.xpose.msra.mxu0 0.0
    %276 = vmatprep.subr.mxu0 0.0
    %277 = vmatpush1.xpose.msra.mxu0 0.0
    %278 = vmatprep.subr.mxu0 0.0
    %279 = vmatpush1.xpose.msra.mxu0 0.0
    %280 = vmatprep.subr.mxu0 0.0
    %281 = vmatpush1.xpose.msra.mxu0 0.0
    %282 = vmatprep.subr.mxu0 0.0
    %283 = vmatpush1.xpose.msra.mxu0 0.0
    %284 = vmatprep.subr.mxu0 0.0
    %285 = vmatpush1.xpose.msra.mxu0 0.0
    %286 = vmatprep.subr.mxu0 0.0
    %287 = vmatpush1.xpose.msra.mxu0 0.0
    %288 = vmatprep.subr.mxu0 0.0
    %289 = vmatpush1.xpose.msra.mxu0 0.0
    %290 = vmatprep.subr.mxu0 0.0
    %291 = vmatpush1.xpose.msra.mxu0 0.0
    %292 = vmatprep.subr.mxu0 0.0
    %293 = vmatpush1.xpose.msra.mxu0 0.0
    %294 = vmatprep.subr.mxu0 0.0
    %295 = vmatpush1.xpose.msra.mxu0 0.0
    %296 = vmatprep.subr.mxu0 0.0
    %297 = vmatpush1.xpose.msra.mxu0 0.0
    %298 = vmatprep.subr.mxu0 0.0
    %299 = vmatpush1.xpose.msra.mxu0 0.0
    %300 = vmatprep.subr.mxu0 0.0
    %301 = vmatpush1.xpose.msra.mxu0 0.0
    %302 = vmatprep.subr.mxu0 0.0
    %303 = vmatpush1.xpose.msra.mxu0 0.0
    %304 = vmatprep.subr.mxu0 0.0
    %305 = vmatpush1.xpose.msra.mxu0 0.0
    %306 = vmatprep.subr.mxu0 0.0
    %307 = vmatpush1.xpose.msra.mxu0 0.0
    %308 = vmatprep.subr.mxu0 0.0
    %309 = vmatpush1.xpose.msra.mxu0 0.0
    %310 = vmatprep.subr.mxu0 0.0
    %311 = vmatpush1.xpose.msra.mxu0 0.0
    %312 = vmatprep.subr.mxu0 0.0
    %313 = vmatpush1.xpose.msra.mxu0 0.0
    %314 = vmatprep.subr.mxu0 0.0
    %315 = vmatpush1.xpose.msra.mxu0 0.0
    %316 = vmatprep.subr.mxu0 0.0
    %317 = vmatpush1.xpose.msra.mxu0 0.0
    %318 = vmatprep.mubr.f32.mxu0 0.0
    %319 = vmatmul.mubr.f32.gmra.mrb[0].mxu0 %v249
    %v320 = vpop.f32.mrb[0].mxu0
    %v321 = vadd.f32 0.0, %v320
    %v322 = vpop.f32.mrb[0].mxu0
    %323 = vdwg.mxu0
    %v325 = vsel %vm101, %v91, 0
    %327 = vmatprep.subr.mxu0 0.0
    %328 = vmatpush1.xpose.msra.mxu0 %v325
    %329 = vmatprep.subr.mxu0 0.0
    %330 = vmatpush1.xpose.msra.mxu0 0.0
    %331 = vmatprep.subr.mxu0 0.0
    %332 = vmatpush1.xpose.msra.mxu0 0.0
    %333 = vmatprep.subr.mxu0 0.0
    %334 = vmatpush1.xpose.msra.mxu0 0.0
    %335 = vmatprep.subr.mxu0 0.0
    %336 = vmatpush1.xpose.msra.mxu0 0.0
    %337 = vmatprep.subr.mxu0 0.0
    %338 = vmatpush1.xpose.msra.mxu0 0.0
    %339 = vmatprep.subr.mxu0 0.0
    %340 = vmatpush1.xpose.msra.mxu0 0.0
    %341 = vmatprep.subr.mxu0 0.0
    %342 = vmatpush1.xpose.msra.mxu0 0.0
    %343 = vmatprep.subr.mxu0 0.0
    %344 = vmatpush1.xpose.msra.mxu0 0.0
    %345 = vmatprep.subr.mxu0 0.0
    %346 = vmatpush1.xpose.msra.mxu0 0.0
    %347 = vmatprep.subr.mxu0 0.0
    %348 = vmatpush1.xpose.msra.mxu0 0.0
    %349 = vmatprep.subr.mxu0 0.0
    %350 = vmatpush1.xpose.msra.mxu0 0.0
    %351 = vmatprep.subr.mxu0 0.0
    %352 = vmatpush1.xpose.msra.mxu0 0.0
    %353 = vmatprep.subr.mxu0 0.0
    %354 = vmatpush1.xpose.msra.mxu0 0.0
    %355 = vmatprep.subr.mxu0 0.0
    %356 = vmatpush1.xpose.msra.mxu0 0.0
    %357 = vmatprep.subr.mxu0 0.0
    %358 = vmatpush1.xpose.msra.mxu0 0.0
    %359 = vmatprep.subr.mxu0 0.0
    %360 = vmatpush1.xpose.msra.mxu0 0.0
    %361 = vmatprep.subr.mxu0 0.0
    %362 = vmatpush1.xpose.msra.mxu0 0.0
    %363 = vmatprep.subr.mxu0 0.0
    %364 = vmatpush1.xpose.msra.mxu0 0.0
    %365 = vmatprep.subr.mxu0 0.0
    %366 = vmatpush1.xpose.msra.mxu0 0.0
    %367 = vmatprep.subr.mxu0 0.0
    %368 = vmatpush1.xpose.msra.mxu0 0.0
    %369 = vmatprep.subr.mxu0 0.0
    %370 = vmatpush1.xpose.msra.mxu0 0.0
    %371 = vmatprep.subr.mxu0 0.0
    %372 = vmatpush1.xpose.msra.mxu0 0.0
    %373 = vmatprep.subr.mxu0 0.0
    %374 = vmatpush1.xpose.msra.mxu0 0.0
    %375 = vmatprep.subr.mxu0 0.0
    %376 = vmatpush1.xpose.msra.mxu0 0.0
    %377 = vmatprep.subr.mxu0 0.0
    %378 = vmatpush1.xpose.msra.mxu0 0.0
    %379 = vmatprep.subr.mxu0 0.0
    %380 = vmatpush1.xpose.msra.mxu0 0.0
    %381 = vmatprep.subr.mxu0 0.0
    %382 = vmatpush1.xpose.msra.mxu0 0.0
    %383 = vmatprep.subr.mxu0 0.0
    %384 = vmatpush1.xpose.msra.mxu0 0.0
    %385 = vmatprep.subr.mxu0 0.0
    %386 = vmatpush1.xpose.msra.mxu0 0.0
    %387 = vmatprep.subr.mxu0 0.0
    %388 = vmatpush1.xpose.msra.mxu0 0.0
    %389 = vmatprep.subr.mxu0 0.0
    %390 = vmatpush1.xpose.msra.mxu0 0.0
    %391 = vmatprep.mubr.f32.mxu0 0.0
    %392 = vmatmul.mubr.f32.gmra.mrb[0].mxu0 %v249
    %v393 = vpop.f32.mrb[0].mxu0
    %v394 = vadd.f32 0.0, %v393
    %v395 = vpop.f32.mrb[0].mxu0
    %396 = vdwg.mxu0
    %vm397 = vcmp.gt.s32.totalorder %v94, 0
    %vm398 = vcmp.gt.s32.totalorder %v95, 0
    %vm399 = vcmp.eq.s32.totalorder %v94, 2
    %vm400 = vcmp.eq.s32.totalorder %v95, 2
    %vm401 = vcmp.eq.s32.totalorder %v94, 4
    %vm402 = vcmp.eq.s32.totalorder %v95, 4
    %vm403 = vmor %vm399, %vm401
    %vm404 = vmor %vm400, %vm402
    %vm405 = vcmp.ge.s32.totalorder %v94, 3
    %vm406 = vcmp.ge.s32.totalorder %v95, 3
    %408 = vset.pattern.permute.xlu0 3
    %409 = vperm.xlu0 %408, %v172
    %v410 = vpop.permute.xlu0 %409
    %413 = vset.pattern.permute.xlu0 3
    %414 = vperm.xlu0 %413, %v245
    %v415 = vpop.permute.xlu0 %414
    %417 = vset.pattern.permute.xlu0 2
    %418 = vperm.xlu0 %417, %v172
    %v419 = vpop.permute.xlu0 %418
    %421 = vset.pattern.permute.xlu0 2
    %422 = vperm.xlu0 %421, %v245
    %v423 = vpop.permute.xlu0 %422
    %v425 = vsel %vm403, %v410, %v419
    %v426 = vsel %vm404, %v415, %v423
    %427 = vset.pattern.permute.xlu0 1
    %428 = vperm.xlu0 %427, %v172
    %v429 = vpop.permute.xlu0 %428
    %431 = vset.pattern.permute.xlu0 1
    %432 = vperm.xlu0 %431, %v245
    %v433 = vpop.permute.xlu0 %432
    %435 = vset.pattern.permute.xlu0 0
    %436 = vperm.xlu0 %435, %v172
    %v437 = vpop.permute.xlu0 %436
    %439 = vset.pattern.permute.xlu0 0
    %440 = vperm.xlu0 %439, %v245
    %v441 = vpop.permute.xlu0 %440
    %v443 = vsel %vm403, %v429, %v437
    %v444 = vsel %vm404, %v433, %v441
    %v445 = vsel %vm405, %v425, %v443
    %v446 = vsel %vm406, %v426, %v444
    %v447 = vlaneseq
    %v448 = vshrl.u32 %v447, 7
    %v449 = vsub.s32 3, %v448
    %v450 = vrot.slane %v321, %v449
    %v451 = vlaneseq
    %v452 = vshrl.u32 %v451, 7
    %v453 = vsub.s32 3, %v452
    %v454 = vrot.slane %v394, %v453
    %v455 = vlaneseq
    %v456 = vshrl.u32 %v455, 7
    %v457 = vsub.s32 2, %v456
    %v458 = vrot.slane %v321, %v457
    %v459 = vlaneseq
    %v460 = vshrl.u32 %v459, 7
    %v461 = vsub.s32 2, %v460
    %v462 = vrot.slane %v394, %v461
    %v463 = vsel %vm403, %v450, %v458
    %v464 = vsel %vm404, %v454, %v462
    %v465 = vlaneseq
    %v466 = vshrl.u32 %v465, 7
    %v467 = vsub.s32 1, %v466
    %v468 = vrot.slane %v321, %v467
    %v469 = vlaneseq
    %v470 = vshrl.u32 %v469, 7
    %v471 = vsub.s32 1, %v470
    %v472 = vrot.slane %v394, %v471
    %v473 = vlaneseq
    %v474 = vshrl.u32 %v473, 7
    %v475 = vsub.s32 0, %v474
    %v476 = vrot.slane %v321, %v475
    %v477 = vlaneseq
    %v478 = vshrl.u32 %v477, 7
    %v479 = vsub.s32 0, %v478
    %v480 = vrot.slane %v394, %v479
    %v481 = vsel %vm403, %v468, %v476
    %v482 = vsel %vm404, %v472, %v480
    %v483 = vsel %vm405, %v463, %v481
    %v484 = vsel %vm406, %v464, %v482
    %v485 = vadd.f32 %v445, %v483
    %v486 = vadd.f32 %v446, %v484
    %vm487 = vcmp.ge.f32.partialorder %v485, 0.0
    %vm488 = vcmp.ge.f32.partialorder %v486, 0.0
    %v489 = vmul.f32 %v485, 0.2
    %v490 = vmul.f32 %v486, 0.2
    %v491 = vsel %vm487, %v485, %v489
    %v492 = vsel %vm488, %v486, %v490
    %v493 = vsel %vm397, %v491, -9e+15
    %v494 = vsel %vm398, %v492, -9e+15
    %vm495 = vcmask 64512
    %v496 = vsel %vm495, %v493, -inf
    %497 = vmax.xlane.f32.xlu0 %v496
    %v498 = vpop.xlane.xlu0 %497
    %v499 = vsel %vm495, %v494, -inf
    %500 = vmax.xlane.f32.xlu0 %v499
    %v501 = vpop.xlane.xlu0 %500
    %v502 = vsub.f32 %v493, %v498
    %v503 = vsub.f32 %v494, %v501
    %v504 = vmul.f32 %v502, 1.442695
    %v505 = vpow.pop %v504
    %v506 = vmul.f32 %v503, 1.442695
    %v507 = vpow.pop %v506
    %v508 = vsel %vm495, %v505, 0.0
    %509 = vadd.xlane.f32.xlu0 %v508
    %v510 = vpop.xlane.xlu0 %509
    %v511 = vsel %vm495, %v507, 0.0
    %512 = vadd.xlane.f32.xlu0 %v511
    %v513 = vpop.xlane.xlu0 %512
    %v514 = vpack.c.bf16 %v505, %v505
    %v515 = vpack.c.bf16 %v507, %v507
    %v516 = vpack.c.bf16 %v90, %v90
    %v517 = vpack.c.bf16 %v91, %v91
    %v519 = vsel %vm495, %v514, 0
    %vm521 = vcmask 1043456
    %v523 = vsel %vm521, %v516, 0
    %525 = vmatprep.subr.bf16.mxu0 0
    %526 = vmatpush1.bf16.msra.mxu0 %v523
    %527 = vmatprep.subr.bf16.mxu0 0
    %528 = vmatpush1.bf16.msra.mxu0 0
    %529 = vmatprep.subr.bf16.mxu0 0
    %530 = vmatpush1.bf16.msra.mxu0 0
    %531 = vmatprep.subr.bf16.mxu0 0
    %532 = vmatpush1.bf16.msra.mxu0 0
    %533 = vmatprep.subr.bf16.mxu0 0
    %534 = vmatpush1.bf16.msra.mxu0 0
    %535 = vmatprep.subr.bf16.mxu0 0
    %536 = vmatpush1.bf16.msra.mxu0 0
    %537 = vmatprep.subr.bf16.mxu0 0
    %538 = vmatpush1.bf16.msra.mxu0 0
    %539 = vmatprep.subr.bf16.mxu0 0
    %540 = vmatpush1.bf16.msra.mxu0 0
    %541 = vmatprep.subr.bf16.mxu0 0
    %542 = vmatpush1.bf16.msra.mxu0 0
    %543 = vmatprep.subr.bf16.mxu0 0
    %544 = vmatpush1.bf16.msra.mxu0 0
    %545 = vmatprep.subr.bf16.mxu0 0
    %546 = vmatpush1.bf16.msra.mxu0 0
    %547 = vmatprep.subr.bf16.mxu0 0
    %548 = vmatpush1.bf16.msra.mxu0 0
    %549 = vmatprep.subr.bf16.mxu0 0
    %550 = vmatpush1.bf16.msra.mxu0 0
    %551 = vmatprep.subr.bf16.mxu0 0
    %552 = vmatpush1.bf16.msra.mxu0 0
    %553 = vmatprep.subr.bf16.mxu0 0
    %554 = vmatpush1.bf16.msra.mxu0 0
    %555 = vmatprep.subr.bf16.mxu0 0
    %556 = vmatpush1.bf16.msra.mxu0 0
    %557 = vmatprep.mubr.bf16.mxu0 0
    %558 = vmatmul.mubr.bf16.gmra.mrb[0].mxu0 %v519
    %v559 = vpop.f32.mrb[0].mxu0
    %v560 = vadd.f32 0.0, %v559
    %v561 = vpop.f32.mrb[0].mxu0
    %v562 = vpop.f32.mrb[0].mxu0
    %v563 = vpop.f32.mrb[0].mxu0
    %564 = vdwg.mxu0
    %v566 = vsel %vm495, %v515, 0
    %v569 = vsel %vm521, %v517, 0
    %571 = vmatprep.subr.bf16.mxu0 0
    %572 = vmatpush1.bf16.msra.mxu0 %v569
    %573 = vmatprep.subr.bf16.mxu0 0
    %574 = vmatpush1.bf16.msra.mxu0 0
    %575 = vmatprep.subr.bf16.mxu0 0
    %576 = vmatpush1.bf16.msra.mxu0 0
    %577 = vmatprep.subr.bf16.mxu0 0
    %578 = vmatpush1.bf16.msra.mxu0 0
    %579 = vmatprep.subr.bf16.mxu0 0
    %580 = vmatpush1.bf16.msra.mxu0 0
    %581 = vmatprep.subr.bf16.mxu0 0
    %582 = vmatpush1.bf16.msra.mxu0 0
    %583 = vmatprep.subr.bf16.mxu0 0
    %584 = vmatpush1.bf16.msra.mxu0 0
    %585 = vmatprep.subr.bf16.mxu0 0
    %586 = vmatpush1.bf16.msra.mxu0 0
    %587 = vmatprep.subr.bf16.mxu0 0
    %588 = vmatpush1.bf16.msra.mxu0 0
    %589 = vmatprep.subr.bf16.mxu0 0
    %590 = vmatpush1.bf16.msra.mxu0 0
    %591 = vmatprep.subr.bf16.mxu0 0
    %592 = vmatpush1.bf16.msra.mxu0 0
    %593 = vmatprep.subr.bf16.mxu0 0
    %594 = vmatpush1.bf16.msra.mxu0 0
    %595 = vmatprep.subr.bf16.mxu0 0
    %596 = vmatpush1.bf16.msra.mxu0 0
    %597 = vmatprep.subr.bf16.mxu0 0
    %598 = vmatpush1.bf16.msra.mxu0 0
    %599 = vmatprep.subr.bf16.mxu0 0
    %600 = vmatpush1.bf16.msra.mxu0 0
    %601 = vmatprep.subr.bf16.mxu0 0
    %602 = vmatpush1.bf16.msra.mxu0 0
    %603 = vmatprep.mubr.bf16.mxu0 0
    %604 = vmatmul.mubr.bf16.gmra.mrb[0].mxu0 %v566
    %v605 = vpop.f32.mrb[0].mxu0
    %v606 = vadd.f32 0.0, %v605
    %v607 = vpop.f32.mrb[0].mxu0
    %v608 = vpop.f32.mrb[0].mxu0
    %v609 = vpop.f32.mrb[0].mxu0
    %610 = vdwg.mxu0
    %v611 = vrcp.pop %v510
    %v612 = vrcp.pop %v513
    %v613 = vmul.f32 %v560, %v611
    %v614 = vmul.f32 %v606, %v612
    %615 = vst.msk [vmem:[#allocation11] sm:$0xff] %vm101, %v613
    %616 = vst.msk [vmem:[#allocation11 + $0x8] sm:$0xff] %vm101, %v614
    // Predicated region
    $region42: #{tpu_custom_call.1} parent=1 // pred_check
      _
    $region43: #{tpu_custom_call.1} parent=1 // pred_check_branch
      %618 = sbr.rel (0) target = $region45
    $region44: #{tpu_custom_call.1} parent=1 // pred_region
      %s620 = ssub.s32 256, 256
      %621 = vsyncadd [#allocation4], %s620
      %s622 = sshll.u32 [#allocation11], 4
      %s623 = int_to_ptr.vmem [resolvable:$true] %s622
      %628 = dma.vmem_to_hbm [thread:$0]  %s623, 256, %s5, [#allocation4], 128, 128, 8
    $region45: #{tpu_custom_call.1} parent=1 // pred_fallthru
      _
    // Predicated region
    $region46: #{tpu_custom_call.1} parent=1 // pred_check
      _
    $region47: #{tpu_custom_call.1} parent=1 // pred_check_branch
      %630 = sbr.rel (0) target = $region49
    $region48: #{tpu_custom_call.1} parent=1 // pred_region
      %631 = dma.done [#allocation4], 256
    $region49: #{tpu_custom_call.1} parent=1 // pred_fallthru
      _
    %632 = vsyncpa [#allocation3], 1
    %633 = vsyncpa [#allocation6], 1
    %634 = vsyncpa [#allocation9], 1
    %635 = vsyncpa [#allocation4], 1

</llo_original>
